<compile_context>
chip_gen: v5e
topology: v5e:2x2
jax: 0.10.0
libtpu: 0.0.40
codegen_flags: <defaults>
</compile_context>

<pallas_src>
import jax
import jax.numpy as jnp
from jax.experimental import pallas as pl
from jax.experimental.pallas import tpu as pltpu


def linear_kernel(x_ref, w_ref, b_ref, o_ref):
    # o = x @ W^T + b : MXU matmul with f32 accumulation, VPU broadcast-add.
    acc = jnp.dot(x_ref[...], w_ref[...], preferred_element_type=jnp.float32)
    o_ref[...] = (acc + b_ref[...]).astype(o_ref.dtype)


def prepare_params(w, b):
    """One-time parameter prep (hoisted out of the per-call path).

    w: (OUT, IN) as stored by nn.Linear; b: (OUT,).
    Returns (w_t, b2d) = ((IN, OUT), (1, OUT)).
    """
    return jnp.transpose(w), b.reshape(1, -1)


@jax.jit
def clf_forward(x, w_t, b2d):
    """x: (B, IN) f32; w_t: (IN, OUT) f32; b2d: (1, OUT) f32 -> (B, OUT) f32."""
    B, IN = x.shape
    OUT = w_t.shape[1]

    cost = pl.CostEstimate(
        flops=2 * B * IN * OUT,
        transcendentals=0,
        bytes_accessed=4 * (B * IN + IN * OUT + OUT + B * OUT),
    )

    return pl.pallas_call(
        linear_kernel,
        out_shape=jax.ShapeDtypeStruct((B, OUT), x.dtype),
        in_specs=[
            pl.BlockSpec(memory_space=pltpu.MemorySpace.VMEM),  # x (full array)
            pl.BlockSpec(memory_space=pltpu.MemorySpace.VMEM),  # W^T (full array)
            pl.BlockSpec(memory_space=pltpu.MemorySpace.VMEM),  # bias (1, OUT)
        ],
        out_specs=pl.BlockSpec(memory_space=pltpu.MemorySpace.VMEM),
        cost_estimate=cost,
    )(x, w_t, b2d)


if __name__ == "__main__":
    IN_FEATURES = 200
    OUT_FEATURES = 65
    BATCH = 4

    key = jax.random.PRNGKey(0)
    kx, kw, kb = jax.random.split(key, 3)

    # nn.Linear default init: U(-1/sqrt(in_features), 1/sqrt(in_features)).
    bound = 1.0 / jnp.sqrt(jnp.float32(IN_FEATURES))
    # PyTorch stores weight as (out, in).
    w = jax.random.uniform(kw, (OUT_FEATURES, IN_FEATURES), jnp.float32,
                           minval=-bound, maxval=bound)
    b = jax.random.uniform(kb, (OUT_FEATURES,), jnp.float32,
                           minval=-bound, maxval=bound)

    # One-time parameter prep (not on the per-call path).
    w_t, b2d = prepare_params(w, b)

    x = jax.random.normal(kx, (BATCH, IN_FEATURES), jnp.float32)

    out = clf_forward(x, w_t, b2d)
    out = jax.block_until_ready(out)

    # Reference check against plain JAX (same math as torch's F.linear).
    ref = x @ w_t + b[None, :]
    assert out.shape == (BATCH, OUT_FEATURES)
    assert jnp.allclose(out, ref, atol=1e-5, rtol=1e-5)

    print("KERNEL_OK")
</pallas_src>

<mosaic_0001>
module attributes {stable_mosaic.version = 11 : i64} {
  func.func @linear_kernel(%arg0: memref<4x200xf32, #tpu.memory_space<vmem>>, %arg1: memref<200x65xf32, #tpu.memory_space<vmem>>, %arg2: memref<1x65xf32, #tpu.memory_space<vmem>>, %arg3: memref<4x65xf32, #tpu.memory_space<vmem>>) attributes {dimension_semantics = [], scalar_prefetch = 0 : i64, scratch_operands = 0 : i64, tpu.core_type = #tpu.core_type<tc>} {
    %c0 = arith.constant 0 : index
    %c0_0 = arith.constant 0 : index
    %0 = vector.load %arg0[%c0, %c0_0] : memref<4x200xf32, #tpu.memory_space<vmem>>, vector<4x200xf32>
    %c0_1 = arith.constant 0 : index
    %c0_2 = arith.constant 0 : index
    %1 = vector.load %arg1[%c0_1, %c0_2] : memref<200x65xf32, #tpu.memory_space<vmem>>, vector<200x65xf32>
    %cst = arith.constant dense<0.000000e+00> : vector<4x65xf32>
    %2 = tpu.matmul %0, %1, %cst {dimension_numbers = #tpu.dot_dimension_numbers<[1], [0], [0], [1], [0, 0, 1, 1], [], []>} : vector<4x200xf32>, vector<200x65xf32>, vector<4x65xf32> -> vector<4x65xf32>
    %c0_3 = arith.constant 0 : index
    %c0_4 = arith.constant 0 : index
    %3 = vector.load %arg2[%c0_3, %c0_4] : memref<1x65xf32, #tpu.memory_space<vmem>>, vector<1x65xf32>
    %4 = vector.broadcast %3 : vector<1x65xf32> to vector<4x65xf32>
    %5 = arith.addf %2, %4 : vector<4x65xf32>
    %c0_5 = arith.constant 0 : index
    %c0_6 = arith.constant 0 : index
    %6 = vector.load %arg3[%c0_5, %c0_6] : memref<4x65xf32, #tpu.memory_space<vmem>>, vector<4x65xf32>
    tpu.vector_store %arg3[%c0_5, %c0_6], %5 {strides = array<i32>} : memref<4x65xf32, #tpu.memory_space<vmem>>, vector<4x65xf32>,
    return
  }
}

</mosaic_0001>

<llo_original>
// kernel: clf_forward.1
$region0: #{clf_forward.1}
  #allocation0 [shape = 'u32[]', space=smem, size = 0x4, offset = 0x4, fixed_abs, tag = 'smem constant byte address 0x4 - core index']
  #allocation1 [shape = 'u32[72,128]{1,0:T(1,128)}', space=vmem, size = 0x9000, scoped, tag = 'internal scratch']
  %s0 = inlined_call_operand.vmem [shape: f32[4,200], index: 0, kind: input, shape index: {}]
  %s1 = inlined_call_operand.vmem [shape: f32[200,65], index: 1, kind: input, shape index: {}]
  %s2 = inlined_call_operand.vmem [shape: f32[1,65], index: 2, kind: input, shape index: {}]
  %s3 = inlined_call_operand.hbm [shape: f32[4,65], index: 3, kind: output, shape index: {}]
  %s4 = sld [smem:[#allocation0]]
  $region22: #{clf_forward.1} parent=0
    _
  %s6 = ssub.s32 1, %s4
  %s7 = scalar_select 0, %s6, %s4
  $region1: #{clf_forward.1} parent=0
    #allocation2 [shape = 'u8[2048]{0}', space=vmem, size = 0x800, scoped, tag = 'output window, operand 0, single buffered']
    #allocation3 [shape = 's32[1]{0}', space=sflag, size = 0x4, scoped, tag = 'scoped memory for clf_forward.1']
    %8 = vsyncpa [#allocation3], 0
    // Predicated region
    $region2: #{clf_forward.1} parent=1 // pred_check
      _
    $region3: #{clf_forward.1} parent=1 // pred_check_branch
      %10 = sbr.rel (0) target = $region5
    $region4: #{clf_forward.1} parent=1 // pred_region
      _
    $region5: #{clf_forward.1} parent=1 // pred_fallthru
      _
    // Predicated region
    $region6: #{clf_forward.1} parent=1 // pred_check
      _
    $region7: #{clf_forward.1} parent=1 // pred_check_branch
      %12 = sbr.rel (0) target = $region9
    $region8: #{clf_forward.1} parent=1 // pred_region
      _
    $region9: #{clf_forward.1} parent=1 // pred_fallthru
      _
    // Predicated region
    $region10: #{clf_forward.1} parent=1 // pred_check
      _
    $region11: #{clf_forward.1} parent=1 // pred_check_branch
      %14 = sbr.rel (0) target = $region13
    $region12: #{clf_forward.1} parent=1 // pred_region
      _
    $region13: #{clf_forward.1} parent=1 // pred_fallthru
      _
    %v15 = vld [vmem:[%s0] sm:$0xff]
    %v16 = vld [vmem:[%s1] sm:$0xff]
    %v17 = vld [vmem:[%s1 + $0x8] sm:$0xff]
    %v18 = vld [vmem:[%s1 + $0x10] sm:$0xff]
    %v19 = vld [vmem:[%s1 + $0x18] sm:$0xff]
    %v20 = vld [vmem:[%s1 + $0x20] sm:$0xff]
    %v21 = vld [vmem:[%s1 + $0x28] sm:$0xff]
    %v22 = vld [vmem:[%s1 + $0x30] sm:$0xff]
    %v23 = vld [vmem:[%s1 + $0x38] sm:$0xff]
    %v24 = vld [vmem:[%s1 + $0x40] sm:$0xff]
    %v25 = vld [vmem:[%s1 + $0x48] sm:$0xff]
    %v26 = vld [vmem:[%s1 + $0x50] sm:$0xff]
    %v27 = vld [vmem:[%s1 + $0x58] sm:$0xff]
    %v28 = vld [vmem:[%s1 + $0x60] sm:$0xff]
    %v29 = vld [vmem:[%s1 + $0x68] sm:$0xff]
    %v30 = vld [vmem:[%s1 + $0x70] sm:$0xff]
    %v31 = vld [vmem:[%s1 + $0x78] sm:$0xff]
    %v32 = vld [vmem:[%s1 + $0x80] sm:$0xff]
    %v33 = vld [vmem:[%s1 + $0x88] sm:$0xff]
    %v34 = vld [vmem:[%s1 + $0x90] sm:$0xff]
    %v35 = vld [vmem:[%s1 + $0x98] sm:$0xff]
    %v36 = vld [vmem:[%s1 + $0xa0] sm:$0xff]
    %v37 = vld [vmem:[%s1 + $0xa8] sm:$0xff]
    %v38 = vld [vmem:[%s1 + $0xb0] sm:$0xff]
    %v39 = vld [vmem:[%s1 + $0xb8] sm:$0xff]
    %v40 = vld [vmem:[%s1 + $0xc0] sm:$0xff]
    %v41 = vld [vmem:[%s2] sm:$0x1]
    %v43 = vperm.slane %v41, 0
    %46 = vst [vmem:[#allocation1] ss:$2 sm:$0xff] %v15
    %v47 = vld.sshfl [vmem:[#allocation1] sm:$0xff pattern:$0x75316420]
    %v48 = vld.sshfl [vmem:[#allocation1 + $0x8] sm:$0xff pattern:$0x75316420]
    %vm50 = vcmask 588800
    %v51 = vsel %vm50, %v48, 0
    %53 = vmatpush.msra.mxu0 %v31
    %54 = vmatpush.msra.mxu0 %v30
    %55 = vmatpush.msra.mxu0 %v29
    %56 = vmatpush.msra.mxu0 %v28
    %57 = vmatpush.msra.mxu0 %v27
    %58 = vmatpush.msra.mxu0 %v26
    %59 = vmatpush.msra.mxu0 %v25
    %60 = vmatpush.msra.mxu0 %v24
    %61 = vmatpush.msra.mxu0 %v23
    %62 = vmatpush.msra.mxu0 %v22
    %63 = vmatpush.msra.mxu0 %v21
    %64 = vmatpush.msra.mxu0 %v20
    %65 = vmatpush.msra.mxu0 %v19
    %66 = vmatpush.msra.mxu0 %v18
    %67 = vmatpush.msra.mxu0 %v17
    %68 = vmatpush.msra.mxu0 %v16
    %69 = vmatmul.f32.gmra.mxu0 %v47
    %v70 = vpop.f32.mrf.mxu0
    %v71 = vadd.f32 %v43, %v70
    %72 = vdwg.mxu0
    %73 = vmatpush.msra.mxu0 0.0
    %74 = vmatpush.msra.mxu0 0.0
    %75 = vmatpush.msra.mxu0 0.0
    %76 = vmatpush.msra.mxu0 0.0
    %77 = vmatpush.msra.mxu0 0.0
    %78 = vmatpush.msra.mxu0 0.0
    %79 = vmatpush.msra.mxu0 0.0
    %80 = vmatpush.msra.mxu0 %v40
    %81 = vmatpush.msra.mxu0 %v39
    %82 = vmatpush.msra.mxu0 %v38
    %83 = vmatpush.msra.mxu0 %v37
    %84 = vmatpush.msra.mxu0 %v36
    %85 = vmatpush.msra.mxu0 %v35
    %86 = vmatpush.msra.mxu0 %v34
    %87 = vmatpush.msra.mxu0 %v33
    %88 = vmatpush.msra.mxu0 %v32
    %89 = vmatmul.f32.gmra.mxu0 %v51
    %v90 = vpop.f32.mrf.mxu0
    %v91 = vadd.f32 %v71, %v90
    %92 = vdwg.mxu0
    %vm93 = vcmask 527360
    %94 = vst.msk [vmem:[#allocation2] sm:$0xf] %vm93, %v91
    // Predicated region
    $region14: #{clf_forward.1} parent=1 // pred_check
      _
    $region15: #{clf_forward.1} parent=1 // pred_check_branch
      %96 = sbr.rel (0) target = $region17
    $region16: #{clf_forward.1} parent=1 // pred_region
      %98 = vsyncadd [#allocation3], 0
      %s100 = sshll.u32 [#allocation2], 4
      %s101 = int_to_ptr.vmem [resolvable:$true] %s100
      %s102 = sshll.u32 %s3, 4
      %s103 = int_to_ptr.hbm [resolvable:$true] %s102
      %105 = dma.vmem_to_hbm [thread:$0]  %s101, 64, %s103, [#allocation3]
    $region17: #{clf_forward.1} parent=1 // pred_fallthru
      _
    // Predicated region
    $region18: #{clf_forward.1} parent=1 // pred_check
      _
    $region19: #{clf_forward.1} parent=1 // pred_check_branch
      %107 = sbr.rel (0) target = $region21
    $region20: #{clf_forward.1} parent=1 // pred_region
      %109 = dma.done [#allocation3], 64
    $region21: #{clf_forward.1} parent=1 // pred_fallthru
      _
    %110 = vsyncpa [#allocation3], 1

</llo_original>
